<compile_context>
chip_gen: v6e
topology: v6e:2x2x1
jax: 0.10.0
libtpu: 0.0.40
codegen_flags: <defaults>
</compile_context>

<pallas_src>
import math

import jax
import jax.numpy as jnp
from jax.experimental import pallas as pl
from jax.experimental.pallas import tpu as pltpu


def value_net_kernel(xT_ref, w1_ref, b1_ref, w2_ref, b2_ref, w3_ref, b3_ref, o_ref):
    """Fused 3-layer MLP on one (num_inputs, tb) transposed batch tile.

    relu(W1 @ x^T + b1) -> relu(W2 @ . + b2) -> sum(. * w3_col, axis=0) + b3,
    stored as a lane-dense (1, tb) row.
    """
    xT = xT_ref[...]                                               # (num_inputs, tb)

    # Layers 1 & 2 on the MXU with N = tb (lane-dense), f32 accumulation;
    # bias add + ReLU in f32 on the VPU.  (hidden, 1) biases broadcast over lanes.
    h1 = jnp.dot(w1_ref[...], xT, preferred_element_type=jnp.float32)       # (hidden, tb)
    h1 = jnp.maximum(h1 + b1_ref[...].astype(jnp.float32), 0.0)
    h2 = jnp.dot(w2_ref[...], h1.astype(w2_ref.dtype),
                 preferred_element_type=jnp.float32)                        # (hidden, tb)
    h2 = jnp.maximum(h2 + b2_ref[...].astype(jnp.float32), 0.0)

    # Layer 3 (out_features == 1): VPU multiply + sublane (XLU) reduction.
    w3_col = w3_ref[...].astype(jnp.float32)                      # (hidden, 1)
    v = jnp.sum(h2 * w3_col, axis=0, keepdims=True)               # (1, tb), lane-dense
    o_ref[...] = (v + b3_ref[0]).astype(o_ref.dtype)


def _round_up(n, m):
    return ((n + m - 1) // m) * m


def value_network_forward(state, params, *, block_rows=2048):
    """state: [B, num_inputs]. Returns [B, 1] float32."""
    w1, b1, w2, b2, w3, b3 = params
    B, num_inputs = state.shape
    hidden = w1.shape[0]

    # Present the batch on the lane axis: x^T is (num_inputs, B).
    x_t = state.T

    if B <= 128:
        tb = B                                       # single tile: block == full dims
    else:
        # Tile must be a multiple of 128 (lane-dense output blocks + (8,128) rule).
        cap = max(128, (block_rows // 128) * 128)
        # Guarantee >= 2 grid steps so v7x can shard the batch over both TCs.
        half = _round_up(pl.cdiv(B, 2), 128)
        tb = min(cap, half)
    grid = (pl.cdiv(B, tb),)

    # Advisory cost so XLA can overlap surrounding ops with this small kernel.
    flops = 2 * B * (num_inputs * hidden + hidden * hidden + hidden)
    bytes_accessed = int(
        state.size * state.dtype.itemsize
        + sum(int(p.size) * p.dtype.itemsize for p in (w1, b1, w2, b2, w3, b3))
        + B * 4)

    out_row = pl.pallas_call(
        value_net_kernel,
        out_shape=jax.ShapeDtypeStruct((1, B), jnp.float32),
        grid_spec=pltpu.PrefetchScalarGridSpec(
            num_scalar_prefetch=0,
            grid=grid,
            in_specs=[
                # x^T: pipelined, lane-dense batch tile.
                pl.BlockSpec((num_inputs, tb), lambda i: (0, i)),
                # Weights / biases: constant index_map -> DMA'd once, resident.
                pl.BlockSpec((hidden, num_inputs), lambda i: (0, 0)),   # W1 (out,in)
                pl.BlockSpec((hidden, 1), lambda i: (0, 0)),            # b1 column
                pl.BlockSpec((hidden, hidden), lambda i: (0, 0)),       # W2 (out,in)
                pl.BlockSpec((hidden, 1), lambda i: (0, 0)),            # b2 column
                pl.BlockSpec((hidden, 1), lambda i: (0, 0)),            # W3 column
                # b3: single scalar -> SMEM, not a padded VMEM tile.
                pl.BlockSpec((1,), lambda i: (0,),
                             memory_space=pltpu.MemorySpace.SMEM),      # b3
            ],
            # Lane-dense output slab: one (1, tb) row per grid step.
            out_specs=pl.BlockSpec((1, tb), lambda i: (0, i)),
        ),
        compiler_params=pltpu.CompilerParams(
            dimension_semantics=("parallel",)),      # v7x: shard batch over 2 TCs
        cost_estimate=pl.CostEstimate(
            flops=flops, transcendentals=0, bytes_accessed=bytes_accessed),
    )(x_t, w1, b1, w2, b2, w3, b3)

    return out_row.reshape(B, 1)


def xavier_uniform(key, shape, gain=1.0):
    # Matches torch.nn.init.xavier_uniform_ (gain=1) for a PyTorch-layout
    # (out_features, in_features) weight: U(-a, a), a = sqrt(6/(fan_in+fan_out)).
    fan_out, fan_in = shape
    a = gain * math.sqrt(6.0 / (fan_in + fan_out))
    return jax.random.uniform(key, shape, jnp.float32, minval=-a, maxval=a)


def init_value_network(key, num_inputs, hidden_dim):
    """Params in kernel layout (done once, no per-call reshapes):
    W1,W2 in PyTorch (out,in) layout; b1,b2 as (hidden,1) columns;
    W3 as (hidden,1) column; b3 as (1,) scalar."""
    k1, k2, k3 = jax.random.split(key, 3)
    w1 = xavier_uniform(k1, (hidden_dim, num_inputs))
    b1 = jnp.zeros((hidden_dim, 1), jnp.float32)
    w2 = xavier_uniform(k2, (hidden_dim, hidden_dim))
    b2 = jnp.zeros((hidden_dim, 1), jnp.float32)
    w3 = xavier_uniform(k3, (1, hidden_dim)).T          # (hidden, 1) column
    b3 = jnp.zeros((1,), jnp.float32)
    return (w1, b1, w2, b2, w3, b3)


if __name__ == "__main__":
    key = jax.random.PRNGKey(0)
    k_params, k_small, k_big = jax.random.split(key, 3)

    num_inputs = 16
    hidden_dim = 32
    params = init_value_network(k_params, num_inputs, hidden_dim)

    def reference_forward(x, ps):
        w1, b1, w2, b2, w3, b3 = ps
        h = jnp.maximum(x @ w1.T + b1.reshape(1, -1), 0.0)
        h = jnp.maximum(h @ w2.T + b2.reshape(1, -1), 0.0)
        # N=1 matmul as an exact f32 weighted sum (same math as h @ w3 + b3).
        return jnp.sum(h * w3.reshape(1, -1), axis=-1, keepdims=True) + b3.reshape(1, 1)

    # 1) Small batch: single grid step (tile == full batch).
    state_small = jax.random.normal(k_small, (8, num_inputs), jnp.float32)
    out_small = jax.block_until_ready(value_network_forward(state_small, params))
    ref_small = reference_forward(state_small, params)
    assert out_small.shape == (8, 1)
    assert jnp.allclose(out_small, ref_small, atol=1e-4, rtol=1e-4)

    # 2) Larger batch with default block_rows: the >=2-grid-step rule gives
    #    tb=256 -> 2 steps (one partial), exercising resident weights, the
    #    batch grid, and masked handling of the padded final tile.
    state_big = jax.random.normal(k_big, (320, num_inputs), jnp.float32)
    out_big = jax.block_until_ready(value_network_forward(state_big, params))
    ref_big = reference_forward(state_big, params)
    assert out_big.shape == (320, 1)
    assert jnp.allclose(out_big, ref_big, atol=1e-4, rtol=1e-4)

    # 3) bf16 activations / matmul weights (feeds the MXU natively on v6e/v7x):
    #    f32 accumulation inside the kernel; loose tolerance vs an f32 reference
    #    evaluated on the same bf16-rounded values.
    params_bf16 = (params[0].astype(jnp.bfloat16), params[1],
                   params[2].astype(jnp.bfloat16), params[3],
                   params[4].astype(jnp.bfloat16), params[5])
    state_bf16 = state_big.astype(jnp.bfloat16)
    out_bf16 = jax.block_until_ready(value_network_forward(state_bf16, params_bf16))
    ref_bf16 = reference_forward(
        state_bf16.astype(jnp.float32),
        tuple(p.astype(jnp.float32) for p in params_bf16))
    assert out_bf16.shape == (320, 1)
    assert jnp.allclose(out_bf16, ref_bf16, atol=5e-2, rtol=5e-2)

    print("KERNEL_OK")
</pallas_src>

<mosaic_0001>
module attributes {stable_mosaic.version = 11 : i64} {
  func.func @value_net_kernel(%arg0: i32, %arg1: memref<16x8xf32, #tpu.memory_space<vmem>>, %arg2: memref<32x16xf32, #tpu.memory_space<vmem>>, %arg3: memref<32x1xf32, #tpu.memory_space<vmem>>, %arg4: memref<32x32xf32, #tpu.memory_space<vmem>>, %arg5: memref<32x1xf32, #tpu.memory_space<vmem>>, %arg6: memref<32x1xf32, #tpu.memory_space<vmem>>, %arg7: memref<1xf32, #tpu.memory_space<smem>>, %arg8: memref<1x8xf32, #tpu.memory_space<vmem>>) attributes {dimension_semantics = [#tpu.dimension_semantics<parallel>], iteration_bounds = array<i64: 1>, scalar_prefetch = 0 : i64, scratch_operands = 0 : i64, tpu.core_type = #tpu.core_type<tc>, window_params = [{transform_indices = @transform_0, window_bounds = array<i64: 16, 8>}, {pipeline_mode = #tpu.pipeline_mode<synchronous>, transform_indices = @transform_1, window_bounds = array<i64: 32, 16>}, {pipeline_mode = #tpu.pipeline_mode<synchronous>, transform_indices = @transform_2, window_bounds = array<i64: 32, 1>}, {pipeline_mode = #tpu.pipeline_mode<synchronous>, transform_indices = @transform_3, window_bounds = array<i64: 32, 32>}, {pipeline_mode = #tpu.pipeline_mode<synchronous>, transform_indices = @transform_4, window_bounds = array<i64: 32, 1>}, {pipeline_mode = #tpu.pipeline_mode<synchronous>, transform_indices = @transform_5, window_bounds = array<i64: 32, 1>}, {transform_indices = @transform_6, window_bounds = array<i64: 1>}, {transform_indices = @transform_7, window_bounds = array<i64: 1, 8>}]} {
    %c0 = arith.constant 0 : index
    %c0_0 = arith.constant 0 : index
    %0 = vector.load %arg1[%c0, %c0_0] : memref<16x8xf32, #tpu.memory_space<vmem>>, vector<16x8xf32>
    %c0_1 = arith.constant 0 : index
    %c0_2 = arith.constant 0 : index
    %1 = vector.load %arg2[%c0_1, %c0_2] : memref<32x16xf32, #tpu.memory_space<vmem>>, vector<32x16xf32>
    %cst = arith.constant dense<0.000000e+00> : vector<32x8xf32>
    %2 = tpu.matmul %1, %0, %cst {dimension_numbers = #tpu.dot_dimension_numbers<[1], [0], [0], [1], [0, 0, 1, 1], [], []>} : vector<32x16xf32>, vector<16x8xf32>, vector<32x8xf32> -> vector<32x8xf32>
    %c0_3 = arith.constant 0 : index
    %c0_4 = arith.constant 0 : index
    %3 = vector.load %arg3[%c0_3, %c0_4] : memref<32x1xf32, #tpu.memory_space<vmem>>, vector<32x1xf32>
    %4 = vector.broadcast %3 : vector<32x1xf32> to vector<32x8xf32>
    %5 = arith.addf %2, %4 : vector<32x8xf32>
    %cst_5 = arith.constant 0.000000e+00 : f32
    %6 = vector.broadcast %cst_5 : f32 to vector<32x8xf32>
    %7 = arith.maximumf %5, %6 : vector<32x8xf32>
    %c0_6 = arith.constant 0 : index
    %c0_7 = arith.constant 0 : index
    %8 = vector.load %arg4[%c0_6, %c0_7] : memref<32x32xf32, #tpu.memory_space<vmem>>, vector<32x32xf32>
    %cst_8 = arith.constant dense<0.000000e+00> : vector<32x8xf32>
    %9 = tpu.matmul %8, %7, %cst_8 {dimension_numbers = #tpu.dot_dimension_numbers<[1], [0], [0], [1], [0, 0, 1, 1], [], []>} : vector<32x32xf32>, vector<32x8xf32>, vector<32x8xf32> -> vector<32x8xf32>
    %c0_9 = arith.constant 0 : index
    %c0_10 = arith.constant 0 : index
    %10 = vector.load %arg5[%c0_9, %c0_10] : memref<32x1xf32, #tpu.memory_space<vmem>>, vector<32x1xf32>
    %11 = vector.broadcast %10 : vector<32x1xf32> to vector<32x8xf32>
    %12 = arith.addf %9, %11 : vector<32x8xf32>
    %cst_11 = arith.constant 0.000000e+00 : f32
    %13 = vector.broadcast %cst_11 : f32 to vector<32x8xf32>
    %14 = arith.maximumf %12, %13 : vector<32x8xf32>
    %c0_12 = arith.constant 0 : index
    %c0_13 = arith.constant 0 : index
    %15 = vector.load %arg6[%c0_12, %c0_13] : memref<32x1xf32, #tpu.memory_space<vmem>>, vector<32x1xf32>
    %16 = vector.broadcast %15 : vector<32x1xf32> to vector<32x8xf32>
    %17 = arith.mulf %14, %16 : vector<32x8xf32>
    %cst_14 = arith.constant dense<0.000000e+00> : vector<8xf32>
    %18 = vector.multi_reduction <add>, %17, %cst_14 [0] : vector<32x8xf32> to vector<8xf32>
    %19 = vector.shape_cast %18 : vector<8xf32> to vector<1x8xf32>
    %c0_15 = arith.constant 0 : index
    %20 = memref.load %arg7[%c0_15] : memref<1xf32, #tpu.memory_space<smem>>
    %21 = vector.broadcast %20 : f32 to vector<1x8xf32>
    %22 = arith.addf %19, %21 : vector<1x8xf32>
    %c0_16 = arith.constant 0 : index
    %c0_17 = arith.constant 0 : index
    %23 = vector.load %arg8[%c0_16, %c0_17] : memref<1x8xf32, #tpu.memory_space<vmem>>, vector<1x8xf32>
    tpu.vector_store %arg8[%c0_16, %c0_17], %22 {strides = array<i32>} : memref<1x8xf32, #tpu.memory_space<vmem>>, vector<1x8xf32>,
    return
  }
  func.func @transform_0(%arg0: i32) -> (i32, i32) {
    %c0_i32 = arith.constant 0 : i32
    %c0_i32_0 = arith.constant 0 : i32
    return %c0_i32, %arg0 : i32, i32
  }
  func.func @transform_1(%arg0: i32) -> (i32, i32) {
    %c0_i32 = arith.constant 0 : i32
    %c0_i32_0 = arith.constant 0 : i32
    %c0_i32_1 = arith.constant 0 : i32
    return %c0_i32, %c0_i32_0 : i32, i32
  }
  func.func @transform_2(%arg0: i32) -> (i32, i32) {
    %c0_i32 = arith.constant 0 : i32
    %c0_i32_0 = arith.constant 0 : i32
    %c0_i32_1 = arith.constant 0 : i32
    return %c0_i32, %c0_i32_0 : i32, i32
  }
  func.func @transform_3(%arg0: i32) -> (i32, i32) {
    %c0_i32 = arith.constant 0 : i32
    %c0_i32_0 = arith.constant 0 : i32
    %c0_i32_1 = arith.constant 0 : i32
    return %c0_i32, %c0_i32_0 : i32, i32
  }
  func.func @transform_4(%arg0: i32) -> (i32, i32) {
    %c0_i32 = arith.constant 0 : i32
    %c0_i32_0 = arith.constant 0 : i32
    %c0_i32_1 = arith.constant 0 : i32
    return %c0_i32, %c0_i32_0 : i32, i32
  }
  func.func @transform_5(%arg0: i32) -> (i32, i32) {
    %c0_i32 = arith.constant 0 : i32
    %c0_i32_0 = arith.constant 0 : i32
    %c0_i32_1 = arith.constant 0 : i32
    return %c0_i32, %c0_i32_0 : i32, i32
  }
  func.func @transform_6(%arg0: i32) -> i32 {
    %c0_i32 = arith.constant 0 : i32
    %c0_i32_0 = arith.constant 0 : i32
    return %c0_i32 : i32
  }
  func.func @transform_7(%arg0: i32) -> (i32, i32) {
    %c0_i32 = arith.constant 0 : i32
    %c0_i32_0 = arith.constant 0 : i32
    return %c0_i32, %arg0 : i32, i32
  }
}

</mosaic_0001>

<llo_original>
// kernel: tpu_custom_call.1
$region0: #{tpu_custom_call.1}
  #allocation0 [shape = 'u32[]', space=smem, size = 0x4, offset = 0x4, fixed_abs, tag = 'smem constant byte address 0x4 - core index']
  #allocation1 [shape = 'u32[144,128]{1,0:T(1,128)}', space=vmem, size = 0x12000, scoped, tag = 'internal scratch']
  #allocation2 [shape = 'f32[1]{0:T(128)S(6)}', space=smem, size = 0x200, scoped, tag = 'scoped memory for tpu_custom_call.1']
  %s0 = inlined_call_operand.vmem [shape: f32[16,8], index: 0, kind: input, shape index: {}]
  %s1 = inlined_call_operand.vmem [shape: f32[32,16], index: 1, kind: input, shape index: {}]
  %s2 = inlined_call_operand.vmem [shape: f32[32,1], index: 2, kind: input, shape index: {}]
  %s3 = inlined_call_operand.vmem [shape: f32[32,32], index: 3, kind: input, shape index: {}]
  %s4 = inlined_call_operand.vmem [shape: f32[32,1], index: 4, kind: input, shape index: {}]
  %s5 = inlined_call_operand.vmem [shape: f32[32,1], index: 5, kind: input, shape index: {}]
  %s6 = inlined_call_operand.<no memory space> [shape: f32[1], index: 6, kind: input, shape index: {}]
  %s7 = inlined_call_operand.hbm [shape: f32[1,8], index: 7, kind: output, shape index: {}]
  %s8 = sld [smem:[#allocation0]]
  $region38: #{tpu_custom_call.1} parent=0
    _
  %s10 = ssub.s32 1, %s8
  %s11 = scalar_select 0, %s10, %s8
  %12 = sst [smem:[#allocation2]] %s6
  $region1: #{tpu_custom_call.1} parent=0
    #allocation3 [shape = 'u8[512]{0}', space=vmem, size = 0x400, scoped, tag = 'output window, operand 0, single buffered']
    #allocation4 [shape = 's32[1]{0}', space=sflag, size = 0x4, scoped, tag = 'scoped memory for tpu_custom_call.1']
    %13 = vsyncpa [#allocation4], 0
    // Predicated region
    $region2: #{tpu_custom_call.1} parent=1 // pred_check
      _
    $region3: #{tpu_custom_call.1} parent=1 // pred_check_branch
      %15 = sbr.rel (0) target = $region5
    $region4: #{tpu_custom_call.1} parent=1 // pred_region
      _
    $region5: #{tpu_custom_call.1} parent=1 // pred_fallthru
      _
    // Predicated region
    $region6: #{tpu_custom_call.1} parent=1 // pred_check
      _
    $region7: #{tpu_custom_call.1} parent=1 // pred_check_branch
      %17 = sbr.rel (0) target = $region9
    $region8: #{tpu_custom_call.1} parent=1 // pred_region
      _
    $region9: #{tpu_custom_call.1} parent=1 // pred_fallthru
      _
    // Predicated region
    $region10: #{tpu_custom_call.1} parent=1 // pred_check
      _
    $region11: #{tpu_custom_call.1} parent=1 // pred_check_branch
      %19 = sbr.rel (0) target = $region13
    $region12: #{tpu_custom_call.1} parent=1 // pred_region
      _
    $region13: #{tpu_custom_call.1} parent=1 // pred_fallthru
      _
    // Predicated region
    $region14: #{tpu_custom_call.1} parent=1 // pred_check
      _
    $region15: #{tpu_custom_call.1} parent=1 // pred_check_branch
      %21 = sbr.rel (0) target = $region17
    $region16: #{tpu_custom_call.1} parent=1 // pred_region
      _
    $region17: #{tpu_custom_call.1} parent=1 // pred_fallthru
      _
    // Predicated region
    $region18: #{tpu_custom_call.1} parent=1 // pred_check
      _
    $region19: #{tpu_custom_call.1} parent=1 // pred_check_branch
      %23 = sbr.rel (0) target = $region21
    $region20: #{tpu_custom_call.1} parent=1 // pred_region
      _
    $region21: #{tpu_custom_call.1} parent=1 // pred_fallthru
      _
    // Predicated region
    $region22: #{tpu_custom_call.1} parent=1 // pred_check
      _
    $region23: #{tpu_custom_call.1} parent=1 // pred_check_branch
      %25 = sbr.rel (0) target = $region25
    $region24: #{tpu_custom_call.1} parent=1 // pred_region
      _
    $region25: #{tpu_custom_call.1} parent=1 // pred_fallthru
      _
    // Predicated region
    $region26: #{tpu_custom_call.1} parent=1 // pred_check
      _
    $region27: #{tpu_custom_call.1} parent=1 // pred_check_branch
      %27 = sbr.rel (0) target = $region29
    $region28: #{tpu_custom_call.1} parent=1 // pred_region
      _
    $region29: #{tpu_custom_call.1} parent=1 // pred_fallthru
      _
    %v28 = vld [vmem:[%s0] sm:$0xff]
    %v29 = vld [vmem:[%s0 + $0x8] sm:$0xff]
    %v30 = vld [vmem:[%s1] sm:$0xff]
    %v31 = vld [vmem:[%s1 + $0x8] sm:$0xff]
    %v32 = vld [vmem:[%s1 + $0x10] sm:$0xff]
    %v33 = vld [vmem:[%s1 + $0x18] sm:$0xff]
    %v34 = vld [vmem:[%s2] sm:$0xff]
    %v35 = vld [vmem:[%s2 + $0x8] sm:$0xff]
    %v36 = vld [vmem:[%s2 + $0x10] sm:$0xff]
    %v37 = vld [vmem:[%s2 + $0x18] sm:$0xff]
    %39 = vset.pattern.permute.xlu0 0
    %40 = vperm.xlu0 %39, %v34
    %v41 = vpop.permute.xlu0 %40
    %44 = vset.pattern.permute.xlu0 0
    %45 = vperm.xlu0 %44, %v35
    %v46 = vpop.permute.xlu0 %45
    %49 = vset.pattern.permute.xlu0 0
    %50 = vperm.xlu0 %49, %v36
    %v51 = vpop.permute.xlu0 %50
    %54 = vset.pattern.permute.xlu0 0
    %55 = vperm.xlu0 %54, %v37
    %v56 = vpop.permute.xlu0 %55
    %vm58 = vcmask 130048
    %v60 = vsel %vm58, %v30, 0
    %v63 = vsel %vm58, %v31, 0
    %v66 = vsel %vm58, %v32, 0
    %v69 = vsel %vm58, %v33, 0
    %71 = vmatprep.subr.mxu0 0.0
    %72 = vmatpush1.msra.mxu0 0.0
    %73 = vmatprep.subr.mxu0 0.0
    %74 = vmatpush1.msra.mxu0 0.0
    %75 = vmatprep.subr.mxu0 0.0
    %76 = vmatpush1.msra.mxu0 0.0
    %77 = vmatprep.subr.mxu0 0.0
    %78 = vmatpush1.msra.mxu0 0.0
    %79 = vmatprep.subr.mxu0 0.0
    %80 = vmatpush1.msra.mxu0 0.0
    %81 = vmatprep.subr.mxu0 0.0
    %82 = vmatpush1.msra.mxu0 0.0
    %83 = vmatprep.subr.mxu0 0.0
    %84 = vmatpush1.msra.mxu0 0.0
    %85 = vmatprep.subr.mxu0 0.0
    %86 = vmatpush1.msra.mxu0 0.0
    %87 = vmatprep.subr.mxu0 0.0
    %88 = vmatpush1.msra.mxu0 0.0
    %89 = vmatprep.subr.mxu0 0.0
    %90 = vmatpush1.msra.mxu0 0.0
    %91 = vmatprep.subr.mxu0 0.0
    %92 = vmatpush1.msra.mxu0 0.0
    %93 = vmatprep.subr.mxu0 0.0
    %94 = vmatpush1.msra.mxu0 0.0
    %95 = vmatprep.subr.mxu0 0.0
    %96 = vmatpush1.msra.mxu0 0.0
    %97 = vmatprep.subr.mxu0 0.0
    %98 = vmatpush1.msra.mxu0 0.0
    %99 = vmatprep.subr.mxu0 0.0
    %100 = vmatpush1.msra.mxu0 %v29
    %101 = vmatprep.subr.mxu0 0.0
    %102 = vmatpush1.msra.mxu0 %v28
    %103 = vmatprep.subr.mxu0 0.0
    %104 = vmatpush2.msra.mxu0 0.0
    %105 = vmatprep.subr.mxu0 0.0
    %106 = vmatpush2.msra.mxu0 0.0
    %107 = vmatprep.subr.mxu0 0.0
    %108 = vmatpush2.msra.mxu0 0.0
    %109 = vmatprep.subr.mxu0 0.0
    %110 = vmatpush2.msra.mxu0 0.0
    %111 = vmatprep.subr.mxu0 0.0
    %112 = vmatpush2.msra.mxu0 0.0
    %113 = vmatprep.subr.mxu0 0.0
    %114 = vmatpush2.msra.mxu0 0.0
    %115 = vmatprep.subr.mxu0 0.0
    %116 = vmatpush2.msra.mxu0 0.0
    %117 = vmatprep.subr.mxu0 0.0
    %118 = vmatpush2.msra.mxu0 0.0
    %119 = vmatprep.subr.mxu0 0.0
    %120 = vmatpush2.msra.mxu0 0.0
    %121 = vmatprep.subr.mxu0 0.0
    %122 = vmatpush2.msra.mxu0 0.0
    %123 = vmatprep.subr.mxu0 0.0
    %124 = vmatpush2.msra.mxu0 0.0
    %125 = vmatprep.subr.mxu0 0.0
    %126 = vmatpush2.msra.mxu0 0.0
    %127 = vmatprep.subr.mxu0 0.0
    %128 = vmatpush2.msra.mxu0 0.0
    %129 = vmatprep.subr.mxu0 0.0
    %130 = vmatpush2.msra.mxu0 0.0
    %131 = vmatprep.subr.mxu0 0.0
    %132 = vmatpush2.msra.mxu0 0.0
    %133 = vmatprep.subr.mxu0 0.0
    %134 = vmatpush2.msra.mxu0 0.0
    %135 = vmatprep.mubr.f32.mxu0 0.0
    %136 = vmatmul.mubr.f32.gmra.mxu0 %v60
    %v137 = vpop.f32.mrf.mxu0
    %v138 = vadd.f32 %v41, %v137
    %v139 = vpop.f32.mrf.mxu0
    %140 = vmatprep.mubr.f32.mxu0 0.0
    %141 = vmatmul.mubr.f32.gmra.mxu0 %v63
    %v142 = vpop.f32.mrf.mxu0
    %v143 = vadd.f32 %v46, %v142
    %v144 = vpop.f32.mrf.mxu0
    %145 = vmatprep.mubr.f32.mxu0 0.0
    %146 = vmatmul.mubr.f32.gmra.mxu0 %v66
    %v147 = vpop.f32.mrf.mxu0
    %v148 = vadd.f32 %v51, %v147
    %v149 = vpop.f32.mrf.mxu0
    %150 = vmatprep.mubr.f32.mxu0 0.0
    %151 = vmatmul.mubr.f32.gmra.mxu0 %v69
    %v152 = vpop.f32.mrf.mxu0
    %v153 = vadd.f32 %v56, %v152
    %v154 = vpop.f32.mrf.mxu0
    %155 = vdwg.mxu0
    %v156 = vmax.f32 %v138, 0.0
    %v157 = vmax.f32 %v143, 0.0
    %v158 = vmax.f32 %v148, 0.0
    %v159 = vmax.f32 %v153, 0.0
    %v160 = vld [vmem:[%s3] sm:$0xff]
    %v161 = vld [vmem:[%s3 + $0x8] sm:$0xff]
    %v162 = vld [vmem:[%s3 + $0x10] sm:$0xff]
    %v163 = vld [vmem:[%s3 + $0x18] sm:$0xff]
    %v164 = vld [vmem:[%s4] sm:$0xff]
    %v165 = vld [vmem:[%s4 + $0x8] sm:$0xff]
    %v166 = vld [vmem:[%s4 + $0x10] sm:$0xff]
    %v167 = vld [vmem:[%s4 + $0x18] sm:$0xff]
    %169 = vset.pattern.permute.xlu0 0
    %170 = vperm.xlu0 %169, %v164
    %v171 = vpop.permute.xlu0 %170
    %174 = vset.pattern.permute.xlu0 0
    %175 = vperm.xlu0 %174, %v165
    %v176 = vpop.permute.xlu0 %175
    %179 = vset.pattern.permute.xlu0 0
    %180 = vperm.xlu0 %179, %v166
    %v181 = vpop.permute.xlu0 %180
    %184 = vset.pattern.permute.xlu0 0
    %185 = vperm.xlu0 %184, %v167
    %v186 = vpop.permute.xlu0 %185
    %vm188 = vcmask 261120
    %v190 = vsel %vm188, %v160, 0
    %v193 = vsel %vm188, %v161, 0
    %v196 = vsel %vm188, %v162, 0
    %v199 = vsel %vm188, %v163, 0
    %201 = vmatprep.subr.mxu0 0.0
    %202 = vmatpush1.msra.mxu0 0.0
    %203 = vmatprep.subr.mxu0 0.0
    %204 = vmatpush1.msra.mxu0 0.0
    %205 = vmatprep.subr.mxu0 0.0
    %206 = vmatpush1.msra.mxu0 0.0
    %207 = vmatprep.subr.mxu0 0.0
    %208 = vmatpush1.msra.mxu0 0.0
    %209 = vmatprep.subr.mxu0 0.0
    %210 = vmatpush1.msra.mxu0 0.0
    %211 = vmatprep.subr.mxu0 0.0
    %212 = vmatpush1.msra.mxu0 0.0
    %213 = vmatprep.subr.mxu0 0.0
    %214 = vmatpush1.msra.mxu0 0.0
    %215 = vmatprep.subr.mxu0 0.0
    %216 = vmatpush1.msra.mxu0 0.0
    %217 = vmatprep.subr.mxu0 0.0
    %218 = vmatpush1.msra.mxu0 0.0
    %219 = vmatprep.subr.mxu0 0.0
    %220 = vmatpush1.msra.mxu0 0.0
    %221 = vmatprep.subr.mxu0 0.0
    %222 = vmatpush1.msra.mxu0 0.0
    %223 = vmatprep.subr.mxu0 0.0
    %224 = vmatpush1.msra.mxu0 0.0
    %225 = vmatprep.subr.mxu0 0.0
    %226 = vmatpush1.msra.mxu0 %v159
    %227 = vmatprep.subr.mxu0 0.0
    %228 = vmatpush1.msra.mxu0 %v158
    %229 = vmatprep.subr.mxu0 0.0
    %230 = vmatpush1.msra.mxu0 %v157
    %231 = vmatprep.subr.mxu0 0.0
    %232 = vmatpush1.msra.mxu0 %v156
    %233 = vmatprep.subr.mxu0 0.0
    %234 = vmatpush2.msra.mxu0 0.0
    %235 = vmatprep.subr.mxu0 0.0
    %236 = vmatpush2.msra.mxu0 0.0
    %237 = vmatprep.subr.mxu0 0.0
    %238 = vmatpush2.msra.mxu0 0.0
    %239 = vmatprep.subr.mxu0 0.0
    %240 = vmatpush2.msra.mxu0 0.0
    %241 = vmatprep.subr.mxu0 0.0
    %242 = vmatpush2.msra.mxu0 0.0
    %243 = vmatprep.subr.mxu0 0.0
    %244 = vmatpush2.msra.mxu0 0.0
    %245 = vmatprep.subr.mxu0 0.0
    %246 = vmatpush2.msra.mxu0 0.0
    %247 = vmatprep.subr.mxu0 0.0
    %248 = vmatpush2.msra.mxu0 0.0
    %249 = vmatprep.subr.mxu0 0.0
    %250 = vmatpush2.msra.mxu0 0.0
    %251 = vmatprep.subr.mxu0 0.0
    %252 = vmatpush2.msra.mxu0 0.0
    %253 = vmatprep.subr.mxu0 0.0
    %254 = vmatpush2.msra.mxu0 0.0
    %255 = vmatprep.subr.mxu0 0.0
    %256 = vmatpush2.msra.mxu0 0.0
    %257 = vmatprep.subr.mxu0 0.0
    %258 = vmatpush2.msra.mxu0 0.0
    %259 = vmatprep.subr.mxu0 0.0
    %260 = vmatpush2.msra.mxu0 0.0
    %261 = vmatprep.subr.mxu0 0.0
    %262 = vmatpush2.msra.mxu0 0.0
    %263 = vmatprep.subr.mxu0 0.0
    %264 = vmatpush2.msra.mxu0 0.0
    %265 = vmatprep.mubr.f32.mxu0 0.0
    %266 = vmatmul.mubr.f32.gmra.mxu0 %v190
    %v267 = vpop.f32.mrf.mxu0
    %v268 = vadd.f32 %v171, %v267
    %v269 = vpop.f32.mrf.mxu0
    %270 = vmatprep.mubr.f32.mxu0 0.0
    %271 = vmatmul.mubr.f32.gmra.mxu0 %v193
    %v272 = vpop.f32.mrf.mxu0
    %v273 = vadd.f32 %v176, %v272
    %v274 = vpop.f32.mrf.mxu0
    %275 = vmatprep.mubr.f32.mxu0 0.0
    %276 = vmatmul.mubr.f32.gmra.mxu0 %v196
    %v277 = vpop.f32.mrf.mxu0
    %v278 = vadd.f32 %v181, %v277
    %v279 = vpop.f32.mrf.mxu0
    %280 = vmatprep.mubr.f32.mxu0 0.0
    %281 = vmatmul.mubr.f32.gmra.mxu0 %v199
    %v282 = vpop.f32.mrf.mxu0
    %v283 = vadd.f32 %v186, %v282
    %v284 = vpop.f32.mrf.mxu0
    %285 = vdwg.mxu0
    %v286 = vmax.f32 %v268, 0.0
    %v287 = vmax.f32 %v273, 0.0
    %v288 = vmax.f32 %v278, 0.0
    %v289 = vmax.f32 %v283, 0.0
    %v290 = vld [vmem:[%s5] sm:$0xff]
    %v291 = vld [vmem:[%s5 + $0x8] sm:$0xff]
    %v292 = vld [vmem:[%s5 + $0x10] sm:$0xff]
    %v293 = vld [vmem:[%s5 + $0x18] sm:$0xff]
    %295 = vset.pattern.permute.xlu0 0
    %296 = vperm.xlu0 %295, %v290
    %v297 = vpop.permute.xlu0 %296
    %300 = vset.pattern.permute.xlu0 0
    %301 = vperm.xlu0 %300, %v291
    %v302 = vpop.permute.xlu0 %301
    %305 = vset.pattern.permute.xlu0 0
    %306 = vperm.xlu0 %305, %v292
    %v307 = vpop.permute.xlu0 %306
    %310 = vset.pattern.permute.xlu0 0
    %311 = vperm.xlu0 %310, %v293
    %v312 = vpop.permute.xlu0 %311
    %v314 = vmul.f32 %v286, %v297
    %v315 = vmul.f32 %v287, %v302
    %v316 = vmul.f32 %v288, %v307
    %v317 = vmul.f32 %v289, %v312
    %vm318 = vcmask 64512
    %v319 = vsel %vm318, %v314, 0.0
    %v320 = vsel %vm318, %v315, 0.0
    %v321 = vadd.f32 %v319, %v320
    %v322 = vsel %vm318, %v316, 0.0
    %v323 = vadd.f32 %v321, %v322
    %v324 = vsel %vm318, %v317, 0.0
    %v325 = vadd.f32 %v323, %v324
    %v326 = vrot.slane %v325, 4
    %v327 = vadd.f32 %v325, %v326
    %v328 = vrot.slane %v327, 2
    %v329 = vadd.f32 %v327, %v328
    %v330 = vrot.slane %v329, 1
    %v331 = vadd.f32 %v329, %v330
    %s332 = sld [smem:[#allocation2]]
    %v333 = vstv %s332
    %v334 = vadd.f32 %v331, %v333
    %vm335 = vcmask 57344
    %336 = vst.msk [vmem:[#allocation3] sm:$0x1] %vm335, %v334
    // Predicated region
    $region30: #{tpu_custom_call.1} parent=1 // pred_check
      _
    $region31: #{tpu_custom_call.1} parent=1 // pred_check_branch
      %338 = sbr.rel (0) target = $region33
    $region32: #{tpu_custom_call.1} parent=1 // pred_region
      %s340 = ssub.s32 16, 16
      %341 = vsyncadd [#allocation4], %s340
      %s343 = sshll.u32 [#allocation3], 4
      %s344 = int_to_ptr.vmem [resolvable:$true] %s343
      %346 = dma.vmem_to_hbm [thread:$0]  %s344, 16, %s7, [#allocation4]
    $region33: #{tpu_custom_call.1} parent=1 // pred_fallthru
      _
    // Predicated region
    $region34: #{tpu_custom_call.1} parent=1 // pred_check
      _
    $region35: #{tpu_custom_call.1} parent=1 // pred_check_branch
      %348 = sbr.rel (0) target = $region37
    $region36: #{tpu_custom_call.1} parent=1 // pred_region
      %349 = dma.done [#allocation4], 16
    $region37: #{tpu_custom_call.1} parent=1 // pred_fallthru
      _
    %350 = vsyncpa [#allocation4], 1

</llo_original>
